<compile_context>
chip_gen: v6e
topology: v6e:2x2x1
jax: 0.10.0
libtpu: 0.0.40
codegen_flags: <defaults>
</compile_context>

<pallas_src>
import functools

import jax
import jax.numpy as jnp
from jax.experimental import pallas as pl
from jax.experimental.pallas import tpu as pltpu


def _round_up(n, m):
    return ((n + m - 1) // m) * m


def actor_net_kernel(x_ref, w1_ref, b1_ref, w2_ref, b2_ref, out_ref):
    # Layer 1: cast x f32->bf16 in-kernel (free under the MXU pass).  With obs=4 the
    # MXU contraction is nearly empty, but the kernel is latency-bound so it is moot.
    h = jnp.dot(x_ref[...].astype(w1_ref.dtype), w1_ref[...],
                preferred_element_type=jnp.float32)
    h = jnp.maximum(h + b1_ref[...], 0.0)                       # (tb, 128) f32, lane-dense
    # Layer 2: 128x128 bf16 MXU matmul, f32 accumulate.
    o = jnp.dot(h.astype(w2_ref.dtype), w2_ref[...],
                preferred_element_type=jnp.float32)
    out_ref[...] = o + b2_ref[...]                              # unmasked 128-wide f32 store


def prepare_params(w1, b1, w2, b2):
    """One-time prep: zero-pad to lane-dense shapes, cast MXU operands to bf16.

    Call once at init; the per-call forward then launches only the pallas_call
    (plus the final slice), with no pad/convert kernels in the hot path.
    """
    obs, hidden = w1.shape
    n_action = w2.shape[1]
    hp = _round_up(hidden, 128)        # lane-dense hidden dim
    na_p = _round_up(n_action, 128)    # lane-dense output slab
    f32, bf16 = jnp.float32, jnp.bfloat16
    w1_p = jnp.pad(w1, ((0, 0), (0, hp - hidden))).astype(bf16)
    b1_p = jnp.pad(b1.reshape(1, hidden), ((0, 0), (0, hp - hidden))).astype(f32)
    w2_p = jnp.pad(w2, ((0, hp - hidden), (0, na_p - n_action))).astype(bf16)
    b2_p = jnp.pad(b2.reshape(1, n_action), ((0, 0), (0, na_p - n_action))).astype(f32)
    return w1_p, b1_p, w2_p, b2_p


@functools.partial(jax.jit, static_argnames=("n_action", "block_batch"))
def actor_net_forward(x, w1_p, b1_p, w2_p, b2_p, *, n_action, block_batch=512):
    batch, obs = x.shape
    hp = w1_p.shape[1]
    na_p = w2_p.shape[1]

    # Single grid step for small batches (per-step overhead dominates at this size);
    # tile only when the batch is large, and then with big (512-row) tiles.
    if batch <= 512:
        tb = _round_up(batch, 8)
        bp = tb
    else:
        tb = block_batch
        bp = _round_up(batch, tb)
    grid = (bp // tb,)

    # Pad the batch only when needed (no-op kernel-count-wise for aligned batches).
    x_p = x if bp == batch else jnp.pad(x, ((0, bp - batch), (0, 0)))

    # Only shard across TensorCores when there is enough work to amortize the
    # per-core fixed cost + duplicated weight DMAs.
    dim_sem = ("parallel",) if grid[0] >= 16 else ("arbitrary",)

    cost = pl.CostEstimate(
        flops=2 * bp * (obs * hp + hp * na_p),
        transcendentals=0,
        bytes_accessed=(x_p.size + b1_p.size + b2_p.size + bp * na_p) * 4
        + (w1_p.size + w2_p.size) * 2,
    )

    out = pl.pallas_call(
        actor_net_kernel,
        out_shape=jax.ShapeDtypeStruct((bp, na_p), jnp.float32),
        grid=grid,
        in_specs=[
            pl.BlockSpec((tb, obs), lambda i: (i, 0)),     # streamed batch tiles (f32)
            pl.BlockSpec((obs, hp), lambda i: (0, 0)),     # W1: VMEM-resident (bf16)
            pl.BlockSpec((1, hp), lambda i: (0, 0)),       # b1: resident (f32)
            pl.BlockSpec((hp, na_p), lambda i: (0, 0)),    # W2: resident (bf16)
            pl.BlockSpec((1, na_p), lambda i: (0, 0)),     # b2: resident (f32)
        ],
        out_specs=pl.BlockSpec((tb, na_p), lambda i: (i, 0)),
        compiler_params=pltpu.CompilerParams(dimension_semantics=dim_sem),
        cost_estimate=cost,
    )(x_p, w1_p, b1_p, w2_p, b2_p)

    # Kept for PyTorch forward semantics; consumers on the hot path may instead read
    # columns [0, n_action) of the padded slab directly and skip this kernel.
    return out[:batch, :n_action]


def init_params(key, obs_size, hidden_size, n_action):
    # Deterministic PyTorch-style init: U(-1/sqrt(fan_in), 1/sqrt(fan_in)).
    k1, k2, k3, k4 = jax.random.split(key, 4)
    bound1 = 1.0 / jnp.sqrt(obs_size)
    bound2 = 1.0 / jnp.sqrt(hidden_size)
    w1 = jax.random.uniform(k1, (obs_size, hidden_size), jnp.float32, -bound1, bound1)
    b1 = jax.random.uniform(k2, (1, hidden_size), jnp.float32, -bound1, bound1)
    w2 = jax.random.uniform(k3, (hidden_size, n_action), jnp.float32, -bound2, bound2)
    b2 = jax.random.uniform(k4, (1, n_action), jnp.float32, -bound2, bound2)
    return w1, b1, w2, b2


if __name__ == "__main__":
    # CartPole-scale ActorNet: obs=4, hidden=32, actions=2; batched rollout of 256 obs.
    obs_size, hidden_size, n_action = 4, 32, 2
    batch = 256

    key = jax.random.PRNGKey(0)
    kx, kp = jax.random.split(key)
    x = jax.random.normal(kx, (batch, obs_size), jnp.float32)
    w1, b1, w2, b2 = init_params(kp, obs_size, hidden_size, n_action)

    # One-time param prep (padding + bf16 cast hoisted out of the per-call path).
    w1_p, b1_p, w2_p, b2_p = prepare_params(w1, b1, w2, b2)
    w1_p, b1_p, w2_p, b2_p = jax.block_until_ready((w1_p, b1_p, w2_p, b2_p))

    out = actor_net_forward(x, w1_p, b1_p, w2_p, b2_p, n_action=n_action)
    out = jax.block_until_ready(out)
    assert out.shape == (batch, n_action)

    # Reference with the same numerics as the kernel (bf16 MXU operands, f32 accumulate).
    xb, w1b, w2b = (a.astype(jnp.bfloat16) for a in (x, w1, w2))
    h_ref = jnp.maximum(
        jnp.dot(xb, w1b, preferred_element_type=jnp.float32) + b1, 0.0)
    ref_bf16 = jnp.dot(h_ref.astype(jnp.bfloat16), w2b,
                       preferred_element_type=jnp.float32) + b2
    assert jnp.allclose(out, ref_bf16, atol=1e-3, rtol=1e-3)

    # Loose sanity check vs the full-f32 PyTorch-equivalent math (bf16 quantization tol).
    ref_f32 = jnp.maximum(x @ w1 + b1, 0.0) @ w2 + b2
    assert jnp.allclose(out, ref_f32, atol=1e-1, rtol=5e-2)

    print("KERNEL_OK")
</pallas_src>

<mosaic_0001>
module attributes {stable_mosaic.version = 11 : i64} {
  func.func @actor_net_kernel(%arg0: i32, %arg1: memref<256x4xf32, #tpu.memory_space<vmem>>, %arg2: memref<4x128xbf16, #tpu.memory_space<vmem>>, %arg3: memref<1x128xf32, #tpu.memory_space<vmem>>, %arg4: memref<128x128xbf16, #tpu.memory_space<vmem>>, %arg5: memref<1x128xf32, #tpu.memory_space<vmem>>, %arg6: memref<256x128xf32, #tpu.memory_space<vmem>>) attributes {dimension_semantics = [#tpu.dimension_semantics<arbitrary>], iteration_bounds = array<i64: 1>, scalar_prefetch = 0 : i64, scratch_operands = 0 : i64, tpu.core_type = #tpu.core_type<tc>, window_params = [{transform_indices = @transform_0, window_bounds = array<i64: 256, 4>}, {pipeline_mode = #tpu.pipeline_mode<synchronous>, transform_indices = @transform_1, window_bounds = array<i64: 4, 128>}, {pipeline_mode = #tpu.pipeline_mode<synchronous>, transform_indices = @transform_2, window_bounds = array<i64: 1, 128>}, {pipeline_mode = #tpu.pipeline_mode<synchronous>, transform_indices = @transform_3, window_bounds = array<i64: 128, 128>}, {pipeline_mode = #tpu.pipeline_mode<synchronous>, transform_indices = @transform_4, window_bounds = array<i64: 1, 128>}, {transform_indices = @transform_5, window_bounds = array<i64: 256, 128>}]} {
    %c0 = arith.constant 0 : index
    %c0_0 = arith.constant 0 : index
    %0 = vector.load %arg1[%c0, %c0_0] : memref<256x4xf32, #tpu.memory_space<vmem>>, vector<256x4xf32>
    %1 = arith.truncf %0 : vector<256x4xf32> to vector<256x4xbf16>
    %c0_1 = arith.constant 0 : index
    %c0_2 = arith.constant 0 : index
    %2 = vector.load %arg2[%c0_1, %c0_2] : memref<4x128xbf16, #tpu.memory_space<vmem>>, vector<4x128xbf16>
    %cst = arith.constant dense<0.000000e+00> : vector<256x128xf32>
    %3 = tpu.matmul %1, %2, %cst {dimension_numbers = #tpu.dot_dimension_numbers<[1], [0], [0], [1], [0, 0, 1, 1], [], []>} : vector<256x4xbf16>, vector<4x128xbf16>, vector<256x128xf32> -> vector<256x128xf32>
    %c0_3 = arith.constant 0 : index
    %c0_4 = arith.constant 0 : index
    %4 = vector.load %arg3[%c0_3, %c0_4] : memref<1x128xf32, #tpu.memory_space<vmem>>, vector<1x128xf32>
    %5 = vector.broadcast %4 : vector<1x128xf32> to vector<256x128xf32>
    %6 = arith.addf %3, %5 : vector<256x128xf32>
    %cst_5 = arith.constant 0.000000e+00 : f32
    %7 = vector.broadcast %cst_5 : f32 to vector<256x128xf32>
    %8 = arith.maximumf %6, %7 : vector<256x128xf32>
    %9 = arith.truncf %8 : vector<256x128xf32> to vector<256x128xbf16>
    %c0_6 = arith.constant 0 : index
    %c0_7 = arith.constant 0 : index
    %10 = vector.load %arg4[%c0_6, %c0_7] : memref<128x128xbf16, #tpu.memory_space<vmem>>, vector<128x128xbf16>
    %cst_8 = arith.constant dense<0.000000e+00> : vector<256x128xf32>
    %11 = tpu.matmul %9, %10, %cst_8 {dimension_numbers = #tpu.dot_dimension_numbers<[1], [0], [0], [1], [0, 0, 1, 1], [], []>} : vector<256x128xbf16>, vector<128x128xbf16>, vector<256x128xf32> -> vector<256x128xf32>
    %c0_9 = arith.constant 0 : index
    %c0_10 = arith.constant 0 : index
    %12 = vector.load %arg5[%c0_9, %c0_10] : memref<1x128xf32, #tpu.memory_space<vmem>>, vector<1x128xf32>
    %13 = vector.broadcast %12 : vector<1x128xf32> to vector<256x128xf32>
    %14 = arith.addf %11, %13 : vector<256x128xf32>
    %c0_11 = arith.constant 0 : index
    %c0_12 = arith.constant 0 : index
    %15 = vector.load %arg6[%c0_11, %c0_12] : memref<256x128xf32, #tpu.memory_space<vmem>>, vector<256x128xf32>
    tpu.vector_store %arg6[%c0_11, %c0_12], %14 {strides = array<i32>} : memref<256x128xf32, #tpu.memory_space<vmem>>, vector<256x128xf32>,
    return
  }
  func.func @transform_0(%arg0: i32) -> (i32, i32) {
    %c0_i32 = arith.constant 0 : i32
    %c0_i32_0 = arith.constant 0 : i32
    return %arg0, %c0_i32 : i32, i32
  }
  func.func @transform_1(%arg0: i32) -> (i32, i32) {
    %c0_i32 = arith.constant 0 : i32
    %c0_i32_0 = arith.constant 0 : i32
    %c0_i32_1 = arith.constant 0 : i32
    return %c0_i32, %c0_i32_0 : i32, i32
  }
  func.func @transform_2(%arg0: i32) -> (i32, i32) {
    %c0_i32 = arith.constant 0 : i32
    %c0_i32_0 = arith.constant 0 : i32
    %c0_i32_1 = arith.constant 0 : i32
    return %c0_i32, %c0_i32_0 : i32, i32
  }
  func.func @transform_3(%arg0: i32) -> (i32, i32) {
    %c0_i32 = arith.constant 0 : i32
    %c0_i32_0 = arith.constant 0 : i32
    %c0_i32_1 = arith.constant 0 : i32
    return %c0_i32, %c0_i32_0 : i32, i32
  }
  func.func @transform_4(%arg0: i32) -> (i32, i32) {
    %c0_i32 = arith.constant 0 : i32
    %c0_i32_0 = arith.constant 0 : i32
    %c0_i32_1 = arith.constant 0 : i32
    return %c0_i32, %c0_i32_0 : i32, i32
  }
  func.func @transform_5(%arg0: i32) -> (i32, i32) {
    %c0_i32 = arith.constant 0 : i32
    %c0_i32_0 = arith.constant 0 : i32
    return %arg0, %c0_i32 : i32, i32
  }
}

</mosaic_0001>

<llo_original>
// kernel: actor_net_forward.1
$region0: #{actor_net_forward.1}
  #allocation0 [shape = 'u32[]', space=smem, size = 0x4, offset = 0x4, fixed_abs, tag = 'smem constant byte address 0x4 - core index']
  #allocation1 [shape = 'u32[144,128]{1,0:T(1,128)}', space=vmem, size = 0x12000, scoped, tag = 'internal scratch']
  %s0 = inlined_call_operand.vmem [shape: f32[256,4], index: 0, kind: input, shape index: {}]
  %s1 = inlined_call_operand.vmem [shape: bf16[4,128], index: 1, kind: input, shape index: {}]
  %s2 = inlined_call_operand.vmem [shape: f32[1,128], index: 2, kind: input, shape index: {}]
  %s3 = inlined_call_operand.vmem [shape: bf16[128,128], index: 3, kind: input, shape index: {}]
  %s4 = inlined_call_operand.vmem [shape: f32[1,128], index: 4, kind: input, shape index: {}]
  %s5 = inlined_call_operand.vmem [shape: f32[256,128], index: 5, kind: output, shape index: {}]
  %s6 = sld [smem:[#allocation0]]
  $region30: #{actor_net_forward.1} parent=0
    _
  %s8 = ssub.s32 1, %s6
  %s9 = scalar_select 0, %s8, %s6
  // Predicated region
  $region2: #{actor_net_forward.1} parent=0 // pred_check
    _
  $region3: #{actor_net_forward.1} parent=0 // pred_check_branch
    %11 = sbr.rel (0) target = $region5
  $region4: #{actor_net_forward.1} parent=0 // pred_region
    _
  $region5: #{actor_net_forward.1} parent=0 // pred_fallthru
    _
  // Predicated region
  $region6: #{actor_net_forward.1} parent=0 // pred_check
    _
  $region7: #{actor_net_forward.1} parent=0 // pred_check_branch
    %13 = sbr.rel (0) target = $region9
  $region8: #{actor_net_forward.1} parent=0 // pred_region
    _
  $region9: #{actor_net_forward.1} parent=0 // pred_fallthru
    _
  // Predicated region
  $region10: #{actor_net_forward.1} parent=0 // pred_check
    _
  $region11: #{actor_net_forward.1} parent=0 // pred_check_branch
    %15 = sbr.rel (0) target = $region13
  $region12: #{actor_net_forward.1} parent=0 // pred_region
    _
  $region13: #{actor_net_forward.1} parent=0 // pred_fallthru
    _
  // Predicated region
  $region14: #{actor_net_forward.1} parent=0 // pred_check
    _
  $region15: #{actor_net_forward.1} parent=0 // pred_check_branch
    %17 = sbr.rel (0) target = $region17
  $region16: #{actor_net_forward.1} parent=0 // pred_region
    _
  $region17: #{actor_net_forward.1} parent=0 // pred_fallthru
    _
  // Predicated region
  $region18: #{actor_net_forward.1} parent=0 // pred_check
    _
  $region19: #{actor_net_forward.1} parent=0 // pred_check_branch
    %19 = sbr.rel (0) target = $region21
  $region20: #{actor_net_forward.1} parent=0 // pred_region
    _
  $region21: #{actor_net_forward.1} parent=0 // pred_fallthru
    _
  %v21 = vld [vmem:[%s0] sm:$0xff]
  %v22 = vld [vmem:[%s0 + $0x8] sm:$0xff]
  %v23 = vld [vmem:[%s0 + $0x10] sm:$0xff]
  %v24 = vld [vmem:[%s0 + $0x18] sm:$0xff]
  %v25 = vld [vmem:[%s0 + $0x20] sm:$0xff]
  %v26 = vld [vmem:[%s0 + $0x28] sm:$0xff]
  %v27 = vld [vmem:[%s0 + $0x30] sm:$0xff]
  %v28 = vld [vmem:[%s0 + $0x38] sm:$0xff]
  %v29 = vld [vmem:[%s0 + $0x40] sm:$0xff]
  %v30 = vld [vmem:[%s0 + $0x48] sm:$0xff]
  %v31 = vld [vmem:[%s0 + $0x50] sm:$0xff]
  %v32 = vld [vmem:[%s0 + $0x58] sm:$0xff]
  %v33 = vld [vmem:[%s0 + $0x60] sm:$0xff]
  %v34 = vld [vmem:[%s0 + $0x68] sm:$0xff]
  %v35 = vld [vmem:[%s0 + $0x70] sm:$0xff]
  %v36 = vld [vmem:[%s0 + $0x78] sm:$0xff]
  %v37 = vld [vmem:[%s0 + $0x80] sm:$0xff]
  %v38 = vld [vmem:[%s0 + $0x88] sm:$0xff]
  %v39 = vld [vmem:[%s0 + $0x90] sm:$0xff]
  %v40 = vld [vmem:[%s0 + $0x98] sm:$0xff]
  %v41 = vld [vmem:[%s0 + $0xa0] sm:$0xff]
  %v42 = vld [vmem:[%s0 + $0xa8] sm:$0xff]
  %v43 = vld [vmem:[%s0 + $0xb0] sm:$0xff]
  %v44 = vld [vmem:[%s0 + $0xb8] sm:$0xff]
  %v45 = vld [vmem:[%s0 + $0xc0] sm:$0xff]
  %v46 = vld [vmem:[%s0 + $0xc8] sm:$0xff]
  %v47 = vld [vmem:[%s0 + $0xd0] sm:$0xff]
  %v48 = vld [vmem:[%s0 + $0xd8] sm:$0xff]
  %v49 = vld [vmem:[%s0 + $0xe0] sm:$0xff]
  %v50 = vld [vmem:[%s0 + $0xe8] sm:$0xff]
  %v51 = vld [vmem:[%s0 + $0xf0] sm:$0xff]
  %v52 = vld [vmem:[%s0 + $0xf8] sm:$0xff]
  %v53 = vpack.c.bf16 %v22, %v21
  %v54 = vpack.c.bf16 %v24, %v23
  %v55 = vpack.c.bf16 %v26, %v25
  %v56 = vpack.c.bf16 %v28, %v27
  %v57 = vpack.c.bf16 %v30, %v29
  %v58 = vpack.c.bf16 %v32, %v31
  %v59 = vpack.c.bf16 %v34, %v33
  %v60 = vpack.c.bf16 %v36, %v35
  %v61 = vpack.c.bf16 %v38, %v37
  %v62 = vpack.c.bf16 %v40, %v39
  %v63 = vpack.c.bf16 %v42, %v41
  %v64 = vpack.c.bf16 %v44, %v43
  %v65 = vpack.c.bf16 %v46, %v45
  %v66 = vpack.c.bf16 %v48, %v47
  %v67 = vpack.c.bf16 %v50, %v49
  %v68 = vpack.c.bf16 %v52, %v51
  %v69 = vld [vmem:[%s1] sm:$0x3]
  %v70 = vld [vmem:[%s2] sm:$0x1]
  %v72 = vlaneseq
  %v73 = vshrl.u32 %v72, 7
  %v74 = vsub.s32 0, %v73
  %v75 = vrot.slane %v70, %v74
  %vm77 = vcmask 31744
  %v79 = vsel %vm77, %v53, 0
  %v82 = vsel %vm77, %v54, 0
  %v85 = vsel %vm77, %v55, 0
  %v88 = vsel %vm77, %v56, 0
  %v91 = vsel %vm77, %v57, 0
  %v94 = vsel %vm77, %v58, 0
  %v97 = vsel %vm77, %v59, 0
  %v100 = vsel %vm77, %v60, 0
  %v103 = vsel %vm77, %v61, 0
  %v106 = vsel %vm77, %v62, 0
  %v109 = vsel %vm77, %v63, 0
  %v112 = vsel %vm77, %v64, 0
  %v115 = vsel %vm77, %v65, 0
  %v118 = vsel %vm77, %v66, 0
  %v121 = vsel %vm77, %v67, 0
  %v124 = vsel %vm77, %v68, 0
  %vm126 = vcmask 1041408
  %v128 = vsel %vm126, %v69, 0
  %130 = vmatprep.subr.bf16.mxu0 0
  %131 = vmatpush1.bf16.msra.mxu0 0
  %132 = vmatprep.subr.bf16.mxu0 0
  %133 = vmatpush1.bf16.msra.mxu0 0
  %134 = vmatprep.subr.bf16.mxu0 0
  %135 = vmatpush1.bf16.msra.mxu0 0
  %136 = vmatprep.subr.bf16.mxu0 0
  %137 = vmatpush1.bf16.msra.mxu0 0
  %138 = vmatprep.subr.bf16.mxu0 0
  %139 = vmatpush1.bf16.msra.mxu0 0
  %140 = vmatprep.subr.bf16.mxu0 0
  %141 = vmatpush1.bf16.msra.mxu0 0
  %142 = vmatprep.subr.bf16.mxu0 0
  %143 = vmatpush1.bf16.msra.mxu0 0
  %144 = vmatprep.subr.bf16.mxu0 0
  %145 = vmatpush1.bf16.msra.mxu0 %v128
  %146 = vmatprep.subr.bf16.mxu0 0
  %147 = vmatpush2.bf16.msra.mxu0 0
  %148 = vmatprep.subr.bf16.mxu0 0
  %149 = vmatpush2.bf16.msra.mxu0 0
  %150 = vmatprep.subr.bf16.mxu0 0
  %151 = vmatpush2.bf16.msra.mxu0 0
  %152 = vmatprep.subr.bf16.mxu0 0
  %153 = vmatpush2.bf16.msra.mxu0 0
  %154 = vmatprep.subr.bf16.mxu0 0
  %155 = vmatpush2.bf16.msra.mxu0 0
  %156 = vmatprep.subr.bf16.mxu0 0
  %157 = vmatpush2.bf16.msra.mxu0 0
  %158 = vmatprep.subr.bf16.mxu0 0
  %159 = vmatpush2.bf16.msra.mxu0 0
  %160 = vmatprep.subr.bf16.mxu0 0
  %161 = vmatpush2.bf16.msra.mxu0 0
  %162 = vmatprep.mubr.bf16.mxu0 0
  %163 = vmatmul.mubr.bf16.gmra.mxu0 %v79
  %v164 = vpop.f32.mrf.mxu0
  %v165 = vadd.f32 %v75, %v164
  %v166 = vpop.f32.mrf.mxu0
  %v167 = vpop.f32.mrf.mxu0
  %v168 = vadd.f32 %v75, %v167
  %v169 = vpop.f32.mrf.mxu0
  %170 = vmatprep.mubr.bf16.mxu0 0
  %171 = vmatmul.mubr.bf16.gmra.mxu0 %v82
  %v172 = vpop.f32.mrf.mxu0
  %v173 = vadd.f32 %v75, %v172
  %v174 = vpop.f32.mrf.mxu0
  %v175 = vpop.f32.mrf.mxu0
  %v176 = vadd.f32 %v75, %v175
  %v177 = vpop.f32.mrf.mxu0
  %178 = vmatprep.mubr.bf16.mxu0 0
  %179 = vmatmul.mubr.bf16.gmra.mxu0 %v85
  %v180 = vpop.f32.mrf.mxu0
  %v181 = vadd.f32 %v75, %v180
  %v182 = vpop.f32.mrf.mxu0
  %v183 = vpop.f32.mrf.mxu0
  %v184 = vadd.f32 %v75, %v183
  %v185 = vpop.f32.mrf.mxu0
  %186 = vmatprep.mubr.bf16.mxu0 0
  %187 = vmatmul.mubr.bf16.gmra.mxu0 %v88
  %v188 = vpop.f32.mrf.mxu0
  %v189 = vadd.f32 %v75, %v188
  %v190 = vpop.f32.mrf.mxu0
  %v191 = vpop.f32.mrf.mxu0
  %v192 = vadd.f32 %v75, %v191
  %v193 = vpop.f32.mrf.mxu0
  %194 = vmatprep.mubr.bf16.mxu0 0
  %195 = vmatmul.mubr.bf16.gmra.mxu0 %v91
  %v196 = vpop.f32.mrf.mxu0
  %v197 = vadd.f32 %v75, %v196
  %v198 = vpop.f32.mrf.mxu0
  %v199 = vpop.f32.mrf.mxu0
  %v200 = vadd.f32 %v75, %v199
  %v201 = vpop.f32.mrf.mxu0
  %202 = vmatprep.mubr.bf16.mxu0 0
  %203 = vmatmul.mubr.bf16.gmra.mxu0 %v94
  %v204 = vpop.f32.mrf.mxu0
  %v205 = vadd.f32 %v75, %v204
  %v206 = vpop.f32.mrf.mxu0
  %v207 = vpop.f32.mrf.mxu0
  %v208 = vadd.f32 %v75, %v207
  %v209 = vpop.f32.mrf.mxu0
  %210 = vmatprep.mubr.bf16.mxu0 0
  %211 = vmatmul.mubr.bf16.gmra.mxu0 %v97
  %v212 = vpop.f32.mrf.mxu0
  %v213 = vadd.f32 %v75, %v212
  %v214 = vpop.f32.mrf.mxu0
  %v215 = vpop.f32.mrf.mxu0
  %v216 = vadd.f32 %v75, %v215
  %v217 = vpop.f32.mrf.mxu0
  %218 = vmatprep.mubr.bf16.mxu0 0
  %219 = vmatmul.mubr.bf16.gmra.mxu0 %v100
  %v220 = vpop.f32.mrf.mxu0
  %v221 = vadd.f32 %v75, %v220
  %v222 = vpop.f32.mrf.mxu0
  %v223 = vpop.f32.mrf.mxu0
  %v224 = vadd.f32 %v75, %v223
  %v225 = vpop.f32.mrf.mxu0
  %226 = vmatprep.mubr.bf16.mxu0 0
  %227 = vmatmul.mubr.bf16.gmra.mxu0 %v103
  %v228 = vpop.f32.mrf.mxu0
  %v229 = vadd.f32 %v75, %v228
  %v230 = vpop.f32.mrf.mxu0
  %v231 = vpop.f32.mrf.mxu0
  %v232 = vadd.f32 %v75, %v231
  %v233 = vpop.f32.mrf.mxu0
  %234 = vmatprep.mubr.bf16.mxu0 0
  %235 = vmatmul.mubr.bf16.gmra.mxu0 %v106
  %v236 = vpop.f32.mrf.mxu0
  %v237 = vadd.f32 %v75, %v236
  %v238 = vpop.f32.mrf.mxu0
  %v239 = vpop.f32.mrf.mxu0
  %v240 = vadd.f32 %v75, %v239
  %v241 = vpop.f32.mrf.mxu0
  %242 = vmatprep.mubr.bf16.mxu0 0
  %243 = vmatmul.mubr.bf16.gmra.mxu0 %v109
  %v244 = vpop.f32.mrf.mxu0
  %v245 = vadd.f32 %v75, %v244
  %v246 = vpop.f32.mrf.mxu0
  %v247 = vpop.f32.mrf.mxu0
  %v248 = vadd.f32 %v75, %v247
  %v249 = vpop.f32.mrf.mxu0
  %250 = vmatprep.mubr.bf16.mxu0 0
  %251 = vmatmul.mubr.bf16.gmra.mxu0 %v112
  %v252 = vpop.f32.mrf.mxu0
  %v253 = vadd.f32 %v75, %v252
  %v254 = vpop.f32.mrf.mxu0
  %v255 = vpop.f32.mrf.mxu0
  %v256 = vadd.f32 %v75, %v255
  %v257 = vpop.f32.mrf.mxu0
  %258 = vmatprep.mubr.bf16.mxu0 0
  %259 = vmatmul.mubr.bf16.gmra.mxu0 %v115
  %v260 = vpop.f32.mrf.mxu0
  %v261 = vadd.f32 %v75, %v260
  %v262 = vpop.f32.mrf.mxu0
  %v263 = vpop.f32.mrf.mxu0
  %v264 = vadd.f32 %v75, %v263
  %v265 = vpop.f32.mrf.mxu0
  %266 = vmatprep.mubr.bf16.mxu0 0
  %267 = vmatmul.mubr.bf16.gmra.mxu0 %v118
  %v268 = vpop.f32.mrf.mxu0
  %v269 = vadd.f32 %v75, %v268
  %v270 = vpop.f32.mrf.mxu0
  %v271 = vpop.f32.mrf.mxu0
  %v272 = vadd.f32 %v75, %v271
  %v273 = vpop.f32.mrf.mxu0
  %274 = vmatprep.mubr.bf16.mxu0 0
  %275 = vmatmul.mubr.bf16.gmra.mxu0 %v121
  %v276 = vpop.f32.mrf.mxu0
  %v277 = vadd.f32 %v75, %v276
  %v278 = vpop.f32.mrf.mxu0
  %v279 = vpop.f32.mrf.mxu0
  %v280 = vadd.f32 %v75, %v279
  %v281 = vpop.f32.mrf.mxu0
  %282 = vmatprep.mubr.bf16.mxu0 0
  %283 = vmatmul.mubr.bf16.gmra.mxu0 %v124
  %v284 = vpop.f32.mrf.mxu0
  %v285 = vadd.f32 %v75, %v284
  %v286 = vpop.f32.mrf.mxu0
  %v287 = vpop.f32.mrf.mxu0
  %v288 = vadd.f32 %v75, %v287
  %v289 = vpop.f32.mrf.mxu0
  %290 = vdwg.mxu0
  %v291 = vmax.f32 %v165, 0.0
  %v292 = vmax.f32 %v168, 0.0
  %v293 = vmax.f32 %v173, 0.0
  %v294 = vmax.f32 %v176, 0.0
  %v295 = vmax.f32 %v181, 0.0
  %v296 = vmax.f32 %v184, 0.0
  %v297 = vmax.f32 %v189, 0.0
  %v298 = vmax.f32 %v192, 0.0
  %v299 = vmax.f32 %v197, 0.0
  %v300 = vmax.f32 %v200, 0.0
  %v301 = vmax.f32 %v205, 0.0
  %v302 = vmax.f32 %v208, 0.0
  %v303 = vmax.f32 %v213, 0.0
  %v304 = vmax.f32 %v216, 0.0
  %v305 = vmax.f32 %v221, 0.0
  %v306 = vmax.f32 %v224, 0.0
  %v307 = vmax.f32 %v229, 0.0
  %v308 = vmax.f32 %v232, 0.0
  %v309 = vmax.f32 %v237, 0.0
  %v310 = vmax.f32 %v240, 0.0
  %v311 = vmax.f32 %v245, 0.0
  %v312 = vmax.f32 %v248, 0.0
  %v313 = vmax.f32 %v253, 0.0
  %v314 = vmax.f32 %v256, 0.0
  %v315 = vmax.f32 %v261, 0.0
  %v316 = vmax.f32 %v264, 0.0
  %v317 = vmax.f32 %v269, 0.0
  %v318 = vmax.f32 %v272, 0.0
  %v319 = vmax.f32 %v277, 0.0
  %v320 = vmax.f32 %v280, 0.0
  %v321 = vmax.f32 %v285, 0.0
  %v322 = vmax.f32 %v288, 0.0
  %v323 = vpack.c.bf16 %v292, %v291
  %v324 = vpack.c.bf16 %v294, %v293
  %v325 = vpack.c.bf16 %v296, %v295
  %v326 = vpack.c.bf16 %v298, %v297
  %v327 = vpack.c.bf16 %v300, %v299
  %v328 = vpack.c.bf16 %v302, %v301
  %v329 = vpack.c.bf16 %v304, %v303
  %v330 = vpack.c.bf16 %v306, %v305
  %v331 = vpack.c.bf16 %v308, %v307
  %v332 = vpack.c.bf16 %v310, %v309
  %v333 = vpack.c.bf16 %v312, %v311
  %v334 = vpack.c.bf16 %v314, %v313
  %v335 = vpack.c.bf16 %v316, %v315
  %v336 = vpack.c.bf16 %v318, %v317
  %v337 = vpack.c.bf16 %v320, %v319
  %v338 = vpack.c.bf16 %v322, %v321
  %v339 = vld [vmem:[%s3] sm:$0xf]
  %v340 = vld [vmem:[%s3 + $0x4] sm:$0xf]
  %v341 = vld [vmem:[%s3 + $0x8] sm:$0xf]
  %v342 = vld [vmem:[%s3 + $0xc] sm:$0xf]
  %v343 = vld [vmem:[%s3 + $0x10] sm:$0xf]
  %v344 = vld [vmem:[%s3 + $0x14] sm:$0xf]
  %v345 = vld [vmem:[%s3 + $0x18] sm:$0xf]
  %v346 = vld [vmem:[%s3 + $0x1c] sm:$0xf]
  %v347 = vld [vmem:[%s3 + $0x20] sm:$0xf]
  %v348 = vld [vmem:[%s3 + $0x24] sm:$0xf]
  %v349 = vld [vmem:[%s3 + $0x28] sm:$0xf]
  %v350 = vld [vmem:[%s3 + $0x2c] sm:$0xf]
  %v351 = vld [vmem:[%s3 + $0x30] sm:$0xf]
  %v352 = vld [vmem:[%s3 + $0x34] sm:$0xf]
  %v353 = vld [vmem:[%s3 + $0x38] sm:$0xf]
  %v354 = vld [vmem:[%s3 + $0x3c] sm:$0xf]
  %v355 = vld [vmem:[%s4] sm:$0x1]
  %v357 = vlaneseq
  %v358 = vshrl.u32 %v357, 7
  %v359 = vsub.s32 0, %v358
  %v360 = vrot.slane %v355, %v359
  %v378 = vunpack.c.l.b16 %v339
  %v379 = vunpack.c.l.b16 %v340
  %v380 = vunpack.c.l.b16 %v341
  %v381 = vunpack.c.l.b16 %v342
  %v382 = vunpack.c.l.b16 %v343
  %v383 = vunpack.c.l.b16 %v344
  %v384 = vunpack.c.l.b16 %v345
  %v385 = vunpack.c.l.b16 %v346
  %v386 = vunpack.c.l.b16 %v347
  %v387 = vunpack.c.l.b16 %v348
  %v388 = vunpack.c.l.b16 %v349
  %v389 = vunpack.c.l.b16 %v350
  %v390 = vunpack.c.l.b16 %v351
  %v391 = vunpack.c.l.b16 %v352
  %v392 = vunpack.c.l.b16 %v353
  %v393 = vunpack.c.l.b16 %v354
  %v394 = vpack.c.b16 %v379, %v378
  %v395 = vpack.c.b16 %v381, %v380
  %v396 = vpack.c.b16 %v383, %v382
  %v397 = vpack.c.b16 %v385, %v384
  %v398 = vpack.c.b16 %v387, %v386
  %v399 = vpack.c.b16 %v389, %v388
  %v400 = vpack.c.b16 %v391, %v390
  %v401 = vpack.c.b16 %v393, %v392
  %410 = vmatprep.subr.bf16.mxu0 0
  %411 = vmatpush1.bf16.msra.mxu0 %v401
  %412 = vmatprep.subr.bf16.mxu0 0
  %413 = vmatpush1.bf16.msra.mxu0 %v400
  %414 = vmatprep.subr.bf16.mxu0 0
  %415 = vmatpush1.bf16.msra.mxu0 %v399
  %416 = vmatprep.subr.bf16.mxu0 0
  %417 = vmatpush1.bf16.msra.mxu0 %v398
  %418 = vmatprep.subr.bf16.mxu0 0
  %419 = vmatpush1.bf16.msra.mxu0 %v397
  %420 = vmatprep.subr.bf16.mxu0 0
  %421 = vmatpush1.bf16.msra.mxu0 %v396
  %422 = vmatprep.subr.bf16.mxu0 0
  %423 = vmatpush1.bf16.msra.mxu0 %v395
  %424 = vmatprep.subr.bf16.mxu0 0
  %425 = vmatpush1.bf16.msra.mxu0 %v394
  %426 = vmatprep.subr.bf16.mxu0 0
  %427 = vmatpush2.bf16.msra.mxu0 0
  %428 = vmatprep.subr.bf16.mxu0 0
  %429 = vmatpush2.bf16.msra.mxu0 0
  %430 = vmatprep.subr.bf16.mxu0 0
  %431 = vmatpush2.bf16.msra.mxu0 0
  %432 = vmatprep.subr.bf16.mxu0 0
  %433 = vmatpush2.bf16.msra.mxu0 0
  %434 = vmatprep.subr.bf16.mxu0 0
  %435 = vmatpush2.bf16.msra.mxu0 0
  %436 = vmatprep.subr.bf16.mxu0 0
  %437 = vmatpush2.bf16.msra.mxu0 0
  %438 = vmatprep.subr.bf16.mxu0 0
  %439 = vmatpush2.bf16.msra.mxu0 0
  %440 = vmatprep.subr.bf16.mxu0 0
  %441 = vmatpush2.bf16.msra.mxu0 0
  %442 = vmatprep.mubr.bf16.mxu0 0
  %443 = vmatmul.mubr.bf16.gmra.mxu0 %v323
  %v444 = vpop.f32.mrf.mxu0
  %v445 = vadd.f32 %v360, %v444
  %v446 = vpop.f32.mrf.mxu0
  %v447 = vpop.f32.mrf.mxu0
  %v448 = vadd.f32 %v360, %v447
  %v449 = vpop.f32.mrf.mxu0
  %450 = vmatprep.mubr.bf16.mxu0 0
  %451 = vmatmul.mubr.bf16.gmra.mxu0 %v324
  %v452 = vpop.f32.mrf.mxu0
  %v453 = vadd.f32 %v360, %v452
  %v454 = vpop.f32.mrf.mxu0
  %v455 = vpop.f32.mrf.mxu0
  %v456 = vadd.f32 %v360, %v455
  %v457 = vpop.f32.mrf.mxu0
  %458 = vmatprep.mubr.bf16.mxu0 0
  %459 = vmatmul.mubr.bf16.gmra.mxu0 %v325
  %v460 = vpop.f32.mrf.mxu0
  %v461 = vadd.f32 %v360, %v460
  %v462 = vpop.f32.mrf.mxu0
  %v463 = vpop.f32.mrf.mxu0
  %v464 = vadd.f32 %v360, %v463
  %v465 = vpop.f32.mrf.mxu0
  %466 = vmatprep.mubr.bf16.mxu0 0
  %467 = vmatmul.mubr.bf16.gmra.mxu0 %v326
  %v468 = vpop.f32.mrf.mxu0
  %v469 = vadd.f32 %v360, %v468
  %v470 = vpop.f32.mrf.mxu0
  %v471 = vpop.f32.mrf.mxu0
  %v472 = vadd.f32 %v360, %v471
  %v473 = vpop.f32.mrf.mxu0
  %474 = vmatprep.mubr.bf16.mxu0 0
  %475 = vmatmul.mubr.bf16.gmra.mxu0 %v327
  %v476 = vpop.f32.mrf.mxu0
  %v477 = vadd.f32 %v360, %v476
  %v478 = vpop.f32.mrf.mxu0
  %v479 = vpop.f32.mrf.mxu0
  %v480 = vadd.f32 %v360, %v479
  %v481 = vpop.f32.mrf.mxu0
  %482 = vmatprep.mubr.bf16.mxu0 0
  %483 = vmatmul.mubr.bf16.gmra.mxu0 %v328
  %v484 = vpop.f32.mrf.mxu0
  %v485 = vadd.f32 %v360, %v484
  %v486 = vpop.f32.mrf.mxu0
  %v487 = vpop.f32.mrf.mxu0
  %v488 = vadd.f32 %v360, %v487
  %v489 = vpop.f32.mrf.mxu0
  %490 = vmatprep.mubr.bf16.mxu0 0
  %491 = vmatmul.mubr.bf16.gmra.mxu0 %v329
  %v492 = vpop.f32.mrf.mxu0
  %v493 = vadd.f32 %v360, %v492
  %v494 = vpop.f32.mrf.mxu0
  %v495 = vpop.f32.mrf.mxu0
  %v496 = vadd.f32 %v360, %v495
  %v497 = vpop.f32.mrf.mxu0
  %498 = vmatprep.mubr.bf16.mxu0 0
  %499 = vmatmul.mubr.bf16.gmra.mxu0 %v330
  %v500 = vpop.f32.mrf.mxu0
  %v501 = vadd.f32 %v360, %v500
  %v502 = vpop.f32.mrf.mxu0
  %v503 = vpop.f32.mrf.mxu0
  %v504 = vadd.f32 %v360, %v503
  %v505 = vpop.f32.mrf.mxu0
  %506 = vmatprep.mubr.bf16.mxu0 0
  %507 = vmatmul.mubr.bf16.gmra.mxu0 %v331
  %v508 = vpop.f32.mrf.mxu0
  %v509 = vadd.f32 %v360, %v508
  %v510 = vpop.f32.mrf.mxu0
  %v511 = vpop.f32.mrf.mxu0
  %v512 = vadd.f32 %v360, %v511
  %v513 = vpop.f32.mrf.mxu0
  %514 = vmatprep.mubr.bf16.mxu0 0
  %515 = vmatmul.mubr.bf16.gmra.mxu0 %v332
  %v516 = vpop.f32.mrf.mxu0
  %v517 = vadd.f32 %v360, %v516
  %v518 = vpop.f32.mrf.mxu0
  %v519 = vpop.f32.mrf.mxu0
  %v520 = vadd.f32 %v360, %v519
  %v521 = vpop.f32.mrf.mxu0
  %522 = vmatprep.mubr.bf16.mxu0 0
  %523 = vmatmul.mubr.bf16.gmra.mxu0 %v333
  %v524 = vpop.f32.mrf.mxu0
  %v525 = vadd.f32 %v360, %v524
  %v526 = vpop.f32.mrf.mxu0
  %v527 = vpop.f32.mrf.mxu0
  %v528 = vadd.f32 %v360, %v527
  %v529 = vpop.f32.mrf.mxu0
  %530 = vmatprep.mubr.bf16.mxu0 0
  %531 = vmatmul.mubr.bf16.gmra.mxu0 %v334
  %v532 = vpop.f32.mrf.mxu0
  %v533 = vadd.f32 %v360, %v532
  %v534 = vpop.f32.mrf.mxu0
  %v535 = vpop.f32.mrf.mxu0
  %v536 = vadd.f32 %v360, %v535
  %v537 = vpop.f32.mrf.mxu0
  %538 = vmatprep.mubr.bf16.mxu0 0
  %539 = vmatmul.mubr.bf16.gmra.mxu0 %v335
  %v540 = vpop.f32.mrf.mxu0
  %v541 = vadd.f32 %v360, %v540
  %v542 = vpop.f32.mrf.mxu0
  %v543 = vpop.f32.mrf.mxu0
  %v544 = vadd.f32 %v360, %v543
  %v545 = vpop.f32.mrf.mxu0
  %546 = vmatprep.mubr.bf16.mxu0 0
  %547 = vmatmul.mubr.bf16.gmra.mxu0 %v336
  %v548 = vpop.f32.mrf.mxu0
  %v549 = vadd.f32 %v360, %v548
  %v550 = vpop.f32.mrf.mxu0
  %v551 = vpop.f32.mrf.mxu0
  %v552 = vadd.f32 %v360, %v551
  %v553 = vpop.f32.mrf.mxu0
  %554 = vmatprep.mubr.bf16.mxu0 0
  %555 = vmatmul.mubr.bf16.gmra.mxu0 %v337
  %v556 = vpop.f32.mrf.mxu0
  %v557 = vadd.f32 %v360, %v556
  %v558 = vpop.f32.mrf.mxu0
  %v559 = vpop.f32.mrf.mxu0
  %v560 = vadd.f32 %v360, %v559
  %v561 = vpop.f32.mrf.mxu0
  %562 = vmatprep.mubr.bf16.mxu0 0
  %563 = vmatmul.mubr.bf16.gmra.mxu0 %v338
  %v564 = vpop.f32.mrf.mxu0
  %v565 = vadd.f32 %v360, %v564
  %v566 = vpop.f32.mrf.mxu0
  %v567 = vpop.f32.mrf.mxu0
  %v568 = vadd.f32 %v360, %v567
  %v569 = vpop.f32.mrf.mxu0
  %570 = vdwg.mxu0
  %571 = vst [vmem:[%s5] sm:$0xff] %v445
  %572 = vst [vmem:[%s5 + $0x8] sm:$0xff] %v448
  %573 = vst [vmem:[%s5 + $0x10] sm:$0xff] %v453
  %574 = vst [vmem:[%s5 + $0x18] sm:$0xff] %v456
  %575 = vst [vmem:[%s5 + $0x20] sm:$0xff] %v461
  %576 = vst [vmem:[%s5 + $0x28] sm:$0xff] %v464
  %577 = vst [vmem:[%s5 + $0x30] sm:$0xff] %v469
  %578 = vst [vmem:[%s5 + $0x38] sm:$0xff] %v472
  %579 = vst [vmem:[%s5 + $0x40] sm:$0xff] %v477
  %580 = vst [vmem:[%s5 + $0x48] sm:$0xff] %v480
  %581 = vst [vmem:[%s5 + $0x50] sm:$0xff] %v485
  %582 = vst [vmem:[%s5 + $0x58] sm:$0xff] %v488
  %583 = vst [vmem:[%s5 + $0x60] sm:$0xff] %v493
  %584 = vst [vmem:[%s5 + $0x68] sm:$0xff] %v496
  %585 = vst [vmem:[%s5 + $0x70] sm:$0xff] %v501
  %586 = vst [vmem:[%s5 + $0x78] sm:$0xff] %v504
  %587 = vst [vmem:[%s5 + $0x80] sm:$0xff] %v509
  %588 = vst [vmem:[%s5 + $0x88] sm:$0xff] %v512
  %589 = vst [vmem:[%s5 + $0x90] sm:$0xff] %v517
  %590 = vst [vmem:[%s5 + $0x98] sm:$0xff] %v520
  %591 = vst [vmem:[%s5 + $0xa0] sm:$0xff] %v525
  %592 = vst [vmem:[%s5 + $0xa8] sm:$0xff] %v528
  %593 = vst [vmem:[%s5 + $0xb0] sm:$0xff] %v533
  %594 = vst [vmem:[%s5 + $0xb8] sm:$0xff] %v536
  %595 = vst [vmem:[%s5 + $0xc0] sm:$0xff] %v541
  %596 = vst [vmem:[%s5 + $0xc8] sm:$0xff] %v544
  %597 = vst [vmem:[%s5 + $0xd0] sm:$0xff] %v549
  %598 = vst [vmem:[%s5 + $0xd8] sm:$0xff] %v552
  %599 = vst [vmem:[%s5 + $0xe0] sm:$0xff] %v557
  %600 = vst [vmem:[%s5 + $0xe8] sm:$0xff] %v560
  %601 = vst [vmem:[%s5 + $0xf0] sm:$0xff] %v565
  %602 = vst [vmem:[%s5 + $0xf8] sm:$0xff] %v568
  // Predicated region
  $region22: #{actor_net_forward.1} parent=0 // pred_check
    _
  $region23: #{actor_net_forward.1} parent=0 // pred_check_branch
    %604 = sbr.rel (0) target = $region25
  $region24: #{actor_net_forward.1} parent=0 // pred_region
    _
  $region25: #{actor_net_forward.1} parent=0 // pred_fallthru
    _
  // Predicated region
  $region26: #{actor_net_forward.1} parent=0 // pred_check
    _
  $region27: #{actor_net_forward.1} parent=0 // pred_check_branch
    %606 = sbr.rel (0) target = $region29
  $region28: #{actor_net_forward.1} parent=0 // pred_region
    _
  $region29: #{actor_net_forward.1} parent=0 // pred_fallthru
    _

</llo_original>
